<compile_context>
chip_gen: v7x
topology: tpu7x:2x2x1
jax: 0.10.0
libtpu: 0.0.40
codegen_flags: <defaults>
</compile_context>

<pallas_src>
import jax
import jax.numpy as jnp
from jax import lax
from jax.experimental import pallas as pl
from jax.experimental.pallas import tpu as pltpu


# ----------------------------------------------------------------------------
# Kernel
# ----------------------------------------------------------------------------
def _make_gaussian_mlp_kernel(n_layers, outsize, two_out, pack, compute_dtype):
    """Kernel over a packed tile: x block (tbg, pack*insize) -> out (tbg, pack*two_out)."""

    def kernel(*refs):
        # refs = (x, W0, b0, ..., W_{L-1}, b_{L-1}, out); weights are block-diag packed.
        x_ref = refs[0]
        out_ref = refs[-1]
        wb = refs[1:-1]

        h = x_ref[...]                                   # f32, lane-dense
        for i in range(n_layers):
            w = wb[2 * i][...]                           # pre-cast to compute_dtype
            b = wb[2 * i + 1][...]                       # f32 bias, tiled per pack slot
            if i > 0:
                # hidden_activation = Tanh (f32, EUP); dropout(p=0.0) is identity.
                h = jnp.tanh(h)
            h = jnp.dot(h.astype(compute_dtype), w,
                        preferred_element_type=jnp.float32) + b

        # h: (tbg, pack*two_out) f32.  Lane j*two_out + k holds feature k of packed
        # row j: k < outsize -> mean (pass through), else log_std -> exp + clamp.
        lane = lax.broadcasted_iota(jnp.int32, h.shape, 1)
        if (two_out & (two_out - 1)) == 0:
            is_mean = (lane & (two_out - 1)) < outsize
        else:
            is_mean = None
            for j in range(pack):
                rng = (lane >= j * two_out) & (lane < j * two_out + outsize)
                is_mean = rng if is_mean is None else (is_mean | rng)

        std_half = jnp.clip(jnp.exp(h), 0.001, 10.0)     # extra exp on mean lanes is discarded
        out_ref[...] = jnp.where(is_mean, h, std_half).astype(out_ref.dtype)

    return kernel


# ----------------------------------------------------------------------------
# Parameter construction / packing (done once, outside the forward pass)
# ----------------------------------------------------------------------------
def init_gaussian_mlp_params(key, insize, outsize, hiddens):
    """Deterministic PyTorch-Linear-style init. Weights stored as (in, out) f32."""
    layer_sizes = [insize] + list(hiddens) + [2 * outsize]
    params = []
    for i in range(len(layer_sizes) - 1):
        fan_in, fan_out = layer_sizes[i], layer_sizes[i + 1]
        key, kw, kb = jax.random.split(key, 3)
        bound = 1.0 / jnp.sqrt(jnp.float32(fan_in))
        w = jax.random.uniform(kw, (fan_in, fan_out), jnp.float32, -bound, bound)
        b = jax.random.uniform(kb, (1, fan_out), jnp.float32, -bound, bound)
        params.append((w, b))
    return params


def _choose_pack(layer_sizes, compute_dtype, max_weight_bytes=8 << 20):
    """Largest pack factor whose block-diagonal weights stay comfortably small."""
    itemsize = jnp.dtype(compute_dtype).itemsize
    for p in (8, 4, 2, 1):
        wbytes = sum(p * a * p * b * itemsize
                     for a, b in zip(layer_sizes[:-1], layer_sizes[1:]))
        if wbytes <= max_weight_bytes:
            return p
    return 1


def pack_gaussian_mlp_params(params, *, insize, outsize, pack=None,
                             compute_dtype=jnp.bfloat16):
    """One-time packing: block-diagonal weights (pack copies) + tiled biases.

    Packing `pack` batch rows into the lane axis makes every kernel load/store
    lane-dense (>=128 lanes for these feature sizes) while keeping HBM bytes
    identical to the unpacked layout.
    """
    layer_sizes = [params[0][0].shape[0]] + [w.shape[1] for w, _ in params]
    assert layer_sizes[0] == insize and layer_sizes[-1] == 2 * outsize
    if pack is None:
        pack = _choose_pack(layer_sizes, compute_dtype)

    eye = jnp.eye(pack, dtype=jnp.float32)
    layers = []
    for w, b in params:
        w_big = jnp.kron(eye, w).astype(compute_dtype)   # block_diag(w, ..., w), cast once
        b_big = jnp.tile(b, (1, pack)).astype(jnp.float32)
        layers.append((w_big, b_big))

    return {"layers": layers, "pack": pack, "insize": insize, "outsize": outsize,
            "compute_dtype": compute_dtype}


# ----------------------------------------------------------------------------
# Forward
# ----------------------------------------------------------------------------
def gaussian_mlp_forward(x, packed, *, tile_b=8192, return_dist=True):
    """Runs the whole MLP in one batch-tiled Pallas call (weights VMEM-resident)."""
    p = packed["pack"]
    insize = packed["insize"]
    outsize = packed["outsize"]
    two_out = 2 * outsize
    layers = packed["layers"]
    cdt = packed["compute_dtype"]

    batch, in_feat = x.shape
    assert in_feat == insize

    # Packed-row tile: whole (packed) batch when it fits, else a large
    # multiple-of-8 tile so BlockSpec pipelining double-buffers the DMAs.
    tbg_max = max(8, ((tile_b // p) // 8) * 8)
    g_needed = (batch + p - 1) // p
    if g_needed <= tbg_max:
        tbg = g_needed
        num_g = g_needed
    else:
        tbg = tbg_max
        num_g = ((g_needed + tbg - 1) // tbg) * tbg
    padded_batch = num_g * p

    # Pad only when required; no dtype cast here (review #3).
    if padded_batch != batch:
        x = jnp.pad(x, ((0, padded_batch - batch), (0, 0)))
    x_packed = x.reshape(num_g, p * insize)              # free contiguous view

    grid = (num_g // tbg,)
    args = [x_packed]
    in_specs = [pl.BlockSpec((tbg, p * insize), lambda i: (i, 0))]
    for w, b in layers:
        args += [w, b]
        # Constant index_map -> block never changes -> weights stay VMEM-resident.
        in_specs += [pl.BlockSpec(w.shape, lambda i: (0, 0)),
                     pl.BlockSpec(b.shape, lambda i: (0, 0))]

    # Explicit VMEM budget, sized against v7x's 64 MiB (review #5).
    weight_bytes = sum(int(w.size) * w.dtype.itemsize + int(b.size) * b.dtype.itemsize
                       for w, b in layers)
    io_bytes = 2 * tbg * p * insize * 4 + 2 * tbg * p * two_out * 4   # double-buffered x/out
    max_width = max(w.shape[1] for w, _ in layers)
    interm_bytes = 4 * tbg * max_width * 4                             # live f32 intermediates
    vmem_limit = int(min(max(2 * weight_bytes + io_bytes + interm_bytes + (8 << 20),
                             32 << 20), 60 << 20))

    kernel = _make_gaussian_mlp_kernel(len(layers), outsize, two_out, p, cdt)

    out = pl.pallas_call(
        kernel,
        out_shape=jax.ShapeDtypeStruct((num_g, p * two_out), jnp.float32),
        grid=grid,
        in_specs=in_specs,
        out_specs=pl.BlockSpec((tbg, p * two_out), lambda i: (i, 0)),
        compiler_params=pltpu.CompilerParams(
            dimension_semantics=("parallel",),   # on v7x, consider pltpu.CORE_PARALLEL
            vmem_limit_bytes=vmem_limit),
    )(*args)

    out = out.reshape(padded_batch, two_out)[:batch]     # free unpack view + slice
    means = out[:, :outsize]
    stds = out[:, outsize:]
    return (means, stds) if return_dist else means


# ----------------------------------------------------------------------------
# Pure-JAX reference (unpacked math) for correctness checking
# ----------------------------------------------------------------------------
def gaussian_mlp_reference(x, params, outsize, compute_dtype=jnp.bfloat16):
    h = x
    for i, (w, b) in enumerate(params):
        if i > 0:
            h = jnp.tanh(h)
        h = jnp.dot(h.astype(compute_dtype), w.astype(compute_dtype),
                    preferred_element_type=jnp.float32) + b
    means = h[:, :outsize]
    stds = jnp.clip(jnp.exp(h[:, outsize:]), 0.001, 10.0)
    return means, stds


if __name__ == "__main__":
    # Shapes consistent with the module: insize=16, hiddens=(32, 32), outsize=8.
    insize, outsize = 16, 8
    hiddens = (32, 32)

    key = jax.random.PRNGKey(0)
    key, kx = jax.random.split(key)
    params = init_gaussian_mlp_params(key, insize, outsize, hiddens)
    packed = pack_gaussian_mlp_params(params, insize=insize, outsize=outsize)

    # --- check 1: tiny batch (single grid step) ---
    batch = 8
    x = jax.random.normal(kx, (batch, insize), jnp.float32)
    means, stds = gaussian_mlp_forward(x, packed, return_dist=True)
    jax.block_until_ready((means, stds))

    ref_means, ref_stds = gaussian_mlp_reference(x, params, outsize)
    assert means.shape == (batch, outsize) and stds.shape == (batch, outsize)
    assert jnp.allclose(means, ref_means, atol=1e-4, rtol=1e-4)
    assert jnp.allclose(stds, ref_stds, atol=1e-4, rtol=1e-4)
    assert jnp.all(stds >= 0.001) and jnp.all(stds <= 10.0)

    # Encoder default path returns only dist.loc (the means).
    loc_only = gaussian_mlp_forward(x, packed, return_dist=False)
    jax.block_until_ready(loc_only)
    assert jnp.allclose(loc_only, ref_means, atol=1e-4, rtol=1e-4)

    # Loose check against pure-f32 math (true PyTorch semantics).
    rm32, rs32 = gaussian_mlp_reference(x, params, outsize, compute_dtype=jnp.float32)
    assert jnp.allclose(means, rm32, atol=5e-2, rtol=5e-2)
    assert jnp.allclose(stds, rs32, atol=5e-2, rtol=5e-2)

    # --- check 2: batch not a multiple of the pack factor, single large tile ---
    key, kx2 = jax.random.split(key)
    x2 = jax.random.normal(kx2, (1001, insize), jnp.float32)
    m2, s2 = gaussian_mlp_forward(x2, packed, return_dist=True)
    jax.block_until_ready((m2, s2))
    rm2, rs2 = gaussian_mlp_reference(x2, params, outsize)
    assert jnp.allclose(m2, rm2, atol=1e-4, rtol=1e-4)
    assert jnp.allclose(s2, rs2, atol=1e-4, rtol=1e-4)

    # --- check 3: force the multi-step tiled + padded grid path ---
    m3, s3 = gaussian_mlp_forward(x2, packed, tile_b=256, return_dist=True)
    jax.block_until_ready((m3, s3))
    assert jnp.allclose(m3, rm2, atol=1e-4, rtol=1e-4)
    assert jnp.allclose(s3, rs2, atol=1e-4, rtol=1e-4)

    print("KERNEL_OK")
</pallas_src>

<mosaic_0001>
module attributes {stable_mosaic.version = 11 : i64} {
  func.func @kernel(%arg0: i32, %arg1: memref<1x128xf32, #tpu.memory_space<vmem>>, %arg2: memref<128x256xbf16, #tpu.memory_space<vmem>>, %arg3: memref<1x256xf32, #tpu.memory_space<vmem>>, %arg4: memref<256x256xbf16, #tpu.memory_space<vmem>>, %arg5: memref<1x256xf32, #tpu.memory_space<vmem>>, %arg6: memref<256x128xbf16, #tpu.memory_space<vmem>>, %arg7: memref<1x128xf32, #tpu.memory_space<vmem>>, %arg8: memref<1x128xf32, #tpu.memory_space<vmem>>) attributes {dimension_semantics = [#tpu.dimension_semantics<parallel>], iteration_bounds = array<i64: 1>, scalar_prefetch = 0 : i64, scratch_operands = 0 : i64, tpu.core_type = #tpu.core_type<tc>, window_params = [{transform_indices = @transform_0, window_bounds = array<i64: 1, 128>}, {pipeline_mode = #tpu.pipeline_mode<synchronous>, transform_indices = @transform_1, window_bounds = array<i64: 128, 256>}, {pipeline_mode = #tpu.pipeline_mode<synchronous>, transform_indices = @transform_2, window_bounds = array<i64: 1, 256>}, {pipeline_mode = #tpu.pipeline_mode<synchronous>, transform_indices = @transform_3, window_bounds = array<i64: 256, 256>}, {pipeline_mode = #tpu.pipeline_mode<synchronous>, transform_indices = @transform_4, window_bounds = array<i64: 1, 256>}, {pipeline_mode = #tpu.pipeline_mode<synchronous>, transform_indices = @transform_5, window_bounds = array<i64: 256, 128>}, {pipeline_mode = #tpu.pipeline_mode<synchronous>, transform_indices = @transform_6, window_bounds = array<i64: 1, 128>}, {transform_indices = @transform_7, window_bounds = array<i64: 1, 128>}]} {
    %c0 = arith.constant 0 : index
    %c0_0 = arith.constant 0 : index
    %0 = vector.load %arg1[%c0, %c0_0] : memref<1x128xf32, #tpu.memory_space<vmem>>, vector<1x128xf32>
    %c0_1 = arith.constant 0 : index
    %c0_2 = arith.constant 0 : index
    %1 = vector.load %arg2[%c0_1, %c0_2] : memref<128x256xbf16, #tpu.memory_space<vmem>>, vector<128x256xbf16>
    %c0_3 = arith.constant 0 : index
    %c0_4 = arith.constant 0 : index
    %2 = vector.load %arg3[%c0_3, %c0_4] : memref<1x256xf32, #tpu.memory_space<vmem>>, vector<1x256xf32>
    %3 = arith.truncf %0 : vector<1x128xf32> to vector<1x128xbf16>
    %cst = arith.constant dense<0.000000e+00> : vector<1x256xf32>
    %4 = tpu.matmul %3, %1, %cst {dimension_numbers = #tpu.dot_dimension_numbers<[1], [0], [0], [1], [0, 0, 1, 1], [], []>} : vector<1x128xbf16>, vector<128x256xbf16>, vector<1x256xf32> -> vector<1x256xf32>
    %5 = arith.addf %4, %2 : vector<1x256xf32>
    %c0_5 = arith.constant 0 : index
    %c0_6 = arith.constant 0 : index
    %6 = vector.load %arg4[%c0_5, %c0_6] : memref<256x256xbf16, #tpu.memory_space<vmem>>, vector<256x256xbf16>
    %c0_7 = arith.constant 0 : index
    %c0_8 = arith.constant 0 : index
    %7 = vector.load %arg5[%c0_7, %c0_8] : memref<1x256xf32, #tpu.memory_space<vmem>>, vector<1x256xf32>
    %8 = math.tanh %5 : vector<1x256xf32>
    %9 = arith.truncf %8 : vector<1x256xf32> to vector<1x256xbf16>
    %cst_9 = arith.constant dense<0.000000e+00> : vector<1x256xf32>
    %10 = tpu.matmul %9, %6, %cst_9 {dimension_numbers = #tpu.dot_dimension_numbers<[1], [0], [0], [1], [0, 0, 1, 1], [], []>} : vector<1x256xbf16>, vector<256x256xbf16>, vector<1x256xf32> -> vector<1x256xf32>
    %11 = arith.addf %10, %7 : vector<1x256xf32>
    %c0_10 = arith.constant 0 : index
    %c0_11 = arith.constant 0 : index
    %12 = vector.load %arg6[%c0_10, %c0_11] : memref<256x128xbf16, #tpu.memory_space<vmem>>, vector<256x128xbf16>
    %c0_12 = arith.constant 0 : index
    %c0_13 = arith.constant 0 : index
    %13 = vector.load %arg7[%c0_12, %c0_13] : memref<1x128xf32, #tpu.memory_space<vmem>>, vector<1x128xf32>
    %14 = math.tanh %11 : vector<1x256xf32>
    %15 = arith.truncf %14 : vector<1x256xf32> to vector<1x256xbf16>
    %cst_14 = arith.constant dense<0.000000e+00> : vector<1x128xf32>
    %16 = tpu.matmul %15, %12, %cst_14 {dimension_numbers = #tpu.dot_dimension_numbers<[1], [0], [0], [1], [0, 0, 1, 1], [], []>} : vector<1x256xbf16>, vector<256x128xbf16>, vector<1x128xf32> -> vector<1x128xf32>
    %17 = arith.addf %16, %13 : vector<1x128xf32>
    %18 = tpu.iota {dimensions = array<i32: 1>} : vector<1x128xi32>
    %c15_i32 = arith.constant 15 : i32
    %19 = vector.broadcast %c15_i32 : i32 to vector<1x128xi32>
    %20 = arith.andi %18, %19 : vector<1x128xi32>
    %c8_i32 = arith.constant 8 : i32
    %21 = vector.broadcast %c8_i32 : i32 to vector<1x128xi32>
    %22 = arith.cmpi slt, %20, %21 : vector<1x128xi32>
    %23 = math.exp %17 : vector<1x128xf32>
    %cst_15 = arith.constant 1.000000e-03 : f32
    %cst_16 = arith.constant 1.000000e+01 : f32
    %24 = vector.broadcast %cst_15 : f32 to vector<1x128xf32>
    %25 = arith.maximumf %24, %23 : vector<1x128xf32>
    %26 = vector.broadcast %cst_16 : f32 to vector<1x128xf32>
    %27 = arith.minimumf %26, %25 : vector<1x128xf32>
    %28 = arith.select %22, %17, %27 : vector<1x128xi1>, vector<1x128xf32>
    %c0_17 = arith.constant 0 : index
    %c0_18 = arith.constant 0 : index
    %29 = vector.load %arg8[%c0_17, %c0_18] : memref<1x128xf32, #tpu.memory_space<vmem>>, vector<1x128xf32>
    tpu.vector_store %arg8[%c0_17, %c0_18], %28 {strides = array<i32>} : memref<1x128xf32, #tpu.memory_space<vmem>>, vector<1x128xf32>,
    return
  }
  func.func @transform_0(%arg0: i32) -> (i32, i32) {
    %c0_i32 = arith.constant 0 : i32
    %c0_i32_0 = arith.constant 0 : i32
    return %arg0, %c0_i32 : i32, i32
  }
  func.func @transform_1(%arg0: i32) -> (i32, i32) {
    %c0_i32 = arith.constant 0 : i32
    %c0_i32_0 = arith.constant 0 : i32
    %c0_i32_1 = arith.constant 0 : i32
    return %c0_i32, %c0_i32_0 : i32, i32
  }
  func.func @transform_2(%arg0: i32) -> (i32, i32) {
    %c0_i32 = arith.constant 0 : i32
    %c0_i32_0 = arith.constant 0 : i32
    %c0_i32_1 = arith.constant 0 : i32
    return %c0_i32, %c0_i32_0 : i32, i32
  }
  func.func @transform_3(%arg0: i32) -> (i32, i32) {
    %c0_i32 = arith.constant 0 : i32
    %c0_i32_0 = arith.constant 0 : i32
    %c0_i32_1 = arith.constant 0 : i32
    return %c0_i32, %c0_i32_0 : i32, i32
  }
  func.func @transform_4(%arg0: i32) -> (i32, i32) {
    %c0_i32 = arith.constant 0 : i32
    %c0_i32_0 = arith.constant 0 : i32
    %c0_i32_1 = arith.constant 0 : i32
    return %c0_i32, %c0_i32_0 : i32, i32
  }
  func.func @transform_5(%arg0: i32) -> (i32, i32) {
    %c0_i32 = arith.constant 0 : i32
    %c0_i32_0 = arith.constant 0 : i32
    %c0_i32_1 = arith.constant 0 : i32
    return %c0_i32, %c0_i32_0 : i32, i32
  }
  func.func @transform_6(%arg0: i32) -> (i32, i32) {
    %c0_i32 = arith.constant 0 : i32
    %c0_i32_0 = arith.constant 0 : i32
    %c0_i32_1 = arith.constant 0 : i32
    return %c0_i32, %c0_i32_0 : i32, i32
  }
  func.func @transform_7(%arg0: i32) -> (i32, i32) {
    %c0_i32 = arith.constant 0 : i32
    %c0_i32_0 = arith.constant 0 : i32
    return %arg0, %c0_i32 : i32, i32
  }
}

</mosaic_0001>

<llo_original>
// kernel: tpu_custom_call.1
$region0: #{tpu_custom_call.1}
  #allocation0 [shape = 'u32[]', space=smem, size = 0x4, offset = 0x4, fixed_abs, tag = 'smem constant byte address 0x4 - core index']
  #allocation1 [shape = 'u32[144,128]{1,0:T(1,128)}', space=vmem, size = 0x12000, scoped, tag = 'internal scratch']
  %s0 = inlined_call_operand.hbm [shape: f32[1,128], index: 0, kind: input, shape index: {}]
  %s1 = inlined_call_operand.hbm [shape: bf16[128,256], index: 1, kind: input, shape index: {}]
  %s2 = inlined_call_operand.vmem [shape: f32[1,256], index: 2, kind: input, shape index: {}]
  %s3 = inlined_call_operand.hbm [shape: bf16[256,256], index: 3, kind: input, shape index: {}]
  %s4 = inlined_call_operand.vmem [shape: f32[1,256], index: 4, kind: input, shape index: {}]
  %s5 = inlined_call_operand.hbm [shape: bf16[256,128], index: 5, kind: input, shape index: {}]
  %s6 = inlined_call_operand.vmem [shape: f32[1,128], index: 6, kind: input, shape index: {}]
  %s7 = inlined_call_operand.hbm [shape: f32[1,128], index: 7, kind: output, shape index: {}]
  %s8 = sld [smem:[#allocation0]]
  $region54: #{tpu_custom_call.1} parent=0
    _
  %s10 = ssub.s32 1, %s8
  %s11 = scalar_select 0, %s10, %s8
  $region1: #{tpu_custom_call.1} parent=0
    #allocation2 [shape = 'u8[512]{0}', space=vmem, size = 0x400, scoped, tag = 'input window, operand 0, single buffered']
    #allocation3 [shape = 's32[1]{0}', space=sflag, size = 0x4, scoped, tag = 'scoped memory for tpu_custom_call.1']
    #allocation4 [shape = 's32[1]{0}', space=sflag, size = 0x4, scoped, tag = 'scoped memory for tpu_custom_call.1']
    #allocation5 [shape = 'u8[65536]{0}', space=vmem, size = 0x10000, scoped, tag = 'input window, operand 1, single buffered']
    #allocation6 [shape = 's32[1]{0}', space=sflag, size = 0x4, scoped, tag = 'scoped memory for tpu_custom_call.1']
    #allocation7 [shape = 'u8[131072]{0}', space=vmem, size = 0x20000, scoped, tag = 'input window, operand 3, single buffered']
    #allocation8 [shape = 'u8[65536]{0}', space=vmem, size = 0x10000, scoped, tag = 'input window, operand 5, single buffered']
    #allocation9 [shape = 's32[1]{0}', space=sflag, size = 0x4, scoped, tag = 'scoped memory for tpu_custom_call.1']
    #allocation10 [shape = 'u8[512]{0}', space=vmem, size = 0x400, scoped, tag = 'output window, operand 0, single buffered']
    %12 = vsyncpa [#allocation3], 0
    %13 = vsyncpa [#allocation6], 0
    %14 = vsyncpa [#allocation9], 0
    %15 = vsyncpa [#allocation4], 0
    // Predicated region
    $region2: #{tpu_custom_call.1} parent=1 // pred_check
      _
    $region3: #{tpu_custom_call.1} parent=1 // pred_check_branch
      %17 = sbr.rel (0) target = $region5
    $region4: #{tpu_custom_call.1} parent=1 // pred_region
      %s19 = ssub.s32 16, 16
      %20 = vsyncadd [#allocation3], %s19
      %s22 = sshll.u32 [#allocation2], 4
      %s23 = int_to_ptr.vmem [resolvable:$true] %s22
      %25 = dma.hbm_to_vmem [thread:$0]  %s0, 16, %s23, [#allocation3]
    $region5: #{tpu_custom_call.1} parent=1 // pred_fallthru
      _
    // Predicated region
    $region6: #{tpu_custom_call.1} parent=1 // pred_check
      _
    $region7: #{tpu_custom_call.1} parent=1 // pred_check_branch
      %27 = sbr.rel (0) target = $region9
    $region8: #{tpu_custom_call.1} parent=1 // pred_region
      %s29 = ssub.s32 2048, 2048
      %30 = vsyncadd [#allocation6], %s29
      %s31 = sshll.u32 [#allocation5], 4
      %s32 = int_to_ptr.vmem [resolvable:$true] %s31
      %37 = dma.hbm_to_vmem [thread:$0]  %s1, 2048, %s32, [#allocation6], 128, 128, 8
    $region9: #{tpu_custom_call.1} parent=1 // pred_fallthru
      _
    // Predicated region
    $region10: #{tpu_custom_call.1} parent=1 // pred_check
      _
    $region11: #{tpu_custom_call.1} parent=1 // pred_check_branch
      %39 = sbr.rel (0) target = $region13
    $region12: #{tpu_custom_call.1} parent=1 // pred_region
      _
    $region13: #{tpu_custom_call.1} parent=1 // pred_fallthru
      _
    // Predicated region
    $region14: #{tpu_custom_call.1} parent=1 // pred_check
      _
    $region15: #{tpu_custom_call.1} parent=1 // pred_check_branch
      %41 = sbr.rel (0) target = $region17
    $region16: #{tpu_custom_call.1} parent=1 // pred_region
      %s43 = ssub.s32 4096, 4096
      %44 = vsyncadd [#allocation6], %s43
      %s45 = sshll.u32 [#allocation7], 4
      %s46 = int_to_ptr.vmem [resolvable:$true] %s45
      %51 = dma.hbm_to_vmem [thread:$0]  %s3, 4096, %s46, [#allocation6], 128, 128, 8
    $region17: #{tpu_custom_call.1} parent=1 // pred_fallthru
      _
    // Predicated region
    $region18: #{tpu_custom_call.1} parent=1 // pred_check
      _
    $region19: #{tpu_custom_call.1} parent=1 // pred_check_branch
      %53 = sbr.rel (0) target = $region21
    $region20: #{tpu_custom_call.1} parent=1 // pred_region
      _
    $region21: #{tpu_custom_call.1} parent=1 // pred_fallthru
      _
    // Predicated region
    $region22: #{tpu_custom_call.1} parent=1 // pred_check
      _
    $region23: #{tpu_custom_call.1} parent=1 // pred_check_branch
      %55 = sbr.rel (0) target = $region25
    $region24: #{tpu_custom_call.1} parent=1 // pred_region
      %s57 = ssub.s32 2048, 2048
      %58 = vsyncadd [#allocation9], %s57
      %s59 = sshll.u32 [#allocation8], 4
      %s60 = int_to_ptr.vmem [resolvable:$true] %s59
      %65 = dma.hbm_to_vmem [thread:$0]  %s5, 2048, %s60, [#allocation9], 64, 64, 4
    $region25: #{tpu_custom_call.1} parent=1 // pred_fallthru
      _
    // Predicated region
    $region26: #{tpu_custom_call.1} parent=1 // pred_check
      _
    $region27: #{tpu_custom_call.1} parent=1 // pred_check_branch
      %67 = sbr.rel (0) target = $region29
    $region28: #{tpu_custom_call.1} parent=1 // pred_region
      _
    $region29: #{tpu_custom_call.1} parent=1 // pred_fallthru
      _
    // Predicated region
    $region30: #{tpu_custom_call.1} parent=1 // pred_check
      _
    $region31: #{tpu_custom_call.1} parent=1 // pred_check_branch
      %69 = sbr.rel (0) target = $region33
    $region32: #{tpu_custom_call.1} parent=1 // pred_region
      %70 = dma.done [#allocation3], 16
    $region33: #{tpu_custom_call.1} parent=1 // pred_fallthru
      _
    // Predicated region
    $region34: #{tpu_custom_call.1} parent=1 // pred_check
      _
    $region35: #{tpu_custom_call.1} parent=1 // pred_check_branch
      %72 = sbr.rel (0) target = $region37
    $region36: #{tpu_custom_call.1} parent=1 // pred_region
      %73 = dma.done [#allocation6], 2048
    $region37: #{tpu_custom_call.1} parent=1 // pred_fallthru
      _
    // Predicated region
    $region38: #{tpu_custom_call.1} parent=1 // pred_check
      _
    $region39: #{tpu_custom_call.1} parent=1 // pred_check_branch
      %75 = sbr.rel (0) target = $region41
    $region40: #{tpu_custom_call.1} parent=1 // pred_region
      %76 = dma.done [#allocation6], 4096
    $region41: #{tpu_custom_call.1} parent=1 // pred_fallthru
      _
    // Predicated region
    $region42: #{tpu_custom_call.1} parent=1 // pred_check
      _
    $region43: #{tpu_custom_call.1} parent=1 // pred_check_branch
      %78 = sbr.rel (0) target = $region45
    $region44: #{tpu_custom_call.1} parent=1 // pred_region
      %79 = dma.done [#allocation9], 2048
    $region45: #{tpu_custom_call.1} parent=1 // pred_fallthru
      _
    %v81 = vld [vmem:[#allocation2] sm:$0x1]
    %v82 = vld [vmem:[#allocation5] sm:$0xff]
    %v83 = vld [vmem:[#allocation5 + $0x8] sm:$0xff]
    %v84 = vld [vmem:[#allocation5 + $0x10] sm:$0xff]
    %v85 = vld [vmem:[#allocation5 + $0x18] sm:$0xff]
    %v86 = vld [vmem:[#allocation5 + $0x20] sm:$0xff]
    %v87 = vld [vmem:[#allocation5 + $0x28] sm:$0xff]
    %v88 = vld [vmem:[#allocation5 + $0x30] sm:$0xff]
    %v89 = vld [vmem:[#allocation5 + $0x38] sm:$0xff]
    %v90 = vld [vmem:[#allocation5 + $0x40] sm:$0xff]
    %v91 = vld [vmem:[#allocation5 + $0x48] sm:$0xff]
    %v92 = vld [vmem:[#allocation5 + $0x50] sm:$0xff]
    %v93 = vld [vmem:[#allocation5 + $0x58] sm:$0xff]
    %v94 = vld [vmem:[#allocation5 + $0x60] sm:$0xff]
    %v95 = vld [vmem:[#allocation5 + $0x68] sm:$0xff]
    %v96 = vld [vmem:[#allocation5 + $0x70] sm:$0xff]
    %v97 = vld [vmem:[#allocation5 + $0x78] sm:$0xff]
    %v98 = vld [vmem:[%s2] sm:$0x3]
    %v99 = vpack.c.bf16 %v81, %v81
    %v116 = vunpack.c.l.b16 %v82
    %v117 = vunpack.c.h.b16 %v82
    %v118 = vunpack.c.l.b16 %v83
    %v119 = vunpack.c.h.b16 %v83
    %v120 = vunpack.c.l.b16 %v84
    %v121 = vunpack.c.h.b16 %v84
    %v122 = vunpack.c.l.b16 %v85
    %v123 = vunpack.c.h.b16 %v85
    %v124 = vunpack.c.l.b16 %v86
    %v125 = vunpack.c.h.b16 %v86
    %v126 = vunpack.c.l.b16 %v87
    %v127 = vunpack.c.h.b16 %v87
    %v128 = vunpack.c.l.b16 %v88
    %v129 = vunpack.c.h.b16 %v88
    %v130 = vunpack.c.l.b16 %v89
    %v131 = vunpack.c.h.b16 %v89
    %v132 = vunpack.c.l.b16 %v90
    %v133 = vunpack.c.h.b16 %v90
    %v134 = vunpack.c.l.b16 %v91
    %v135 = vunpack.c.h.b16 %v91
    %v136 = vunpack.c.l.b16 %v92
    %v137 = vunpack.c.h.b16 %v92
    %v138 = vunpack.c.l.b16 %v93
    %v139 = vunpack.c.h.b16 %v93
    %v140 = vunpack.c.l.b16 %v94
    %v141 = vunpack.c.h.b16 %v94
    %v142 = vunpack.c.l.b16 %v95
    %v143 = vunpack.c.h.b16 %v95
    %v144 = vunpack.c.l.b16 %v96
    %v145 = vunpack.c.h.b16 %v96
    %v146 = vunpack.c.l.b16 %v97
    %v147 = vunpack.c.h.b16 %v97
    %v148 = vpack.c.b16 %v118, %v116
    %v149 = vpack.c.b16 %v119, %v117
    %v150 = vpack.c.b16 %v122, %v120
    %v151 = vpack.c.b16 %v123, %v121
    %v152 = vpack.c.b16 %v126, %v124
    %v153 = vpack.c.b16 %v127, %v125
    %v154 = vpack.c.b16 %v130, %v128
    %v155 = vpack.c.b16 %v131, %v129
    %v156 = vpack.c.b16 %v134, %v132
    %v157 = vpack.c.b16 %v135, %v133
    %v158 = vpack.c.b16 %v138, %v136
    %v159 = vpack.c.b16 %v139, %v137
    %v160 = vpack.c.b16 %v142, %v140
    %v161 = vpack.c.b16 %v143, %v141
    %v162 = vpack.c.b16 %v146, %v144
    %v163 = vpack.c.b16 %v147, %v145
    %v181 = vlaneseq
    %v182 = vshrl.u32 %v181, 7
    %v183 = vsub.s32 0, %v182
    %v184 = vrot.slane %v98, %v183
    %v185 = vlaneseq
    %v186 = vshrl.u32 %v185, 7
    %v187 = vsub.s32 1, %v186
    %v188 = vrot.slane %v98, %v187
    %191 = vmatprep.subr.bf16.mxu0 %v149
    %192 = vmatpush1.bf16.msra.mxu0 %v148
    %193 = vmatprep.subr.bf16.mxu0 %v151
    %194 = vmatpush1.bf16.msra.mxu0 %v150
    %195 = vmatprep.subr.bf16.mxu0 %v153
    %196 = vmatpush1.bf16.msra.mxu0 %v152
    %197 = vmatprep.subr.bf16.mxu0 %v155
    %198 = vmatpush1.bf16.msra.mxu0 %v154
    %199 = vmatprep.subr.bf16.mxu0 %v157
    %200 = vmatpush1.bf16.msra.mxu0 %v156
    %201 = vmatprep.subr.bf16.mxu0 %v159
    %202 = vmatpush1.bf16.msra.mxu0 %v158
    %203 = vmatprep.subr.bf16.mxu0 %v161
    %204 = vmatpush1.bf16.msra.mxu0 %v160
    %205 = vmatprep.subr.bf16.mxu0 %v163
    %206 = vmatpush1.bf16.msra.mxu0 %v162
    %207 = vmatprep.subr.bf16.mxu0 0
    %208 = vmatpush1.bf16.msra.mxu0 0
    %209 = vmatprep.subr.bf16.mxu0 0
    %210 = vmatpush1.bf16.msra.mxu0 0
    %211 = vmatprep.subr.bf16.mxu0 0
    %212 = vmatpush1.bf16.msra.mxu0 0
    %213 = vmatprep.subr.bf16.mxu0 0
    %214 = vmatpush1.bf16.msra.mxu0 0
    %215 = vmatprep.subr.bf16.mxu0 0
    %216 = vmatpush1.bf16.msra.mxu0 0
    %217 = vmatprep.subr.bf16.mxu0 0
    %218 = vmatpush1.bf16.msra.mxu0 0
    %219 = vmatprep.subr.bf16.mxu0 0
    %220 = vmatpush1.bf16.msra.mxu0 0
    %221 = vmatprep.subr.bf16.mxu0 0
    %222 = vmatpush1.bf16.msra.mxu0 0
    %223 = vmatprep.mubr.bf16.mxu0 0
    %224 = vmatmul.mubr.bf16.gmra.mrb[0].mxu0 %v99
    %v225 = vpop.f32.mrb[0].mxu0
    %v226 = vadd.f32 %v184, %v225
    %v227 = vpop.f32.mrb[0].mxu0
    %v228 = vadd.f32 %v188, %v227
    %v229 = vpop.f32.mrb[0].mxu0
    %v230 = vpop.f32.mrb[0].mxu0
    %231 = vdwg.mxu0
    %v232 = vld [vmem:[#allocation7] sm:$0xff]
    %v233 = vld [vmem:[#allocation7 + $0x8] sm:$0xff]
    %v234 = vld [vmem:[#allocation7 + $0x10] sm:$0xff]
    %v235 = vld [vmem:[#allocation7 + $0x18] sm:$0xff]
    %v236 = vld [vmem:[#allocation7 + $0x20] sm:$0xff]
    %v237 = vld [vmem:[#allocation7 + $0x28] sm:$0xff]
    %v238 = vld [vmem:[#allocation7 + $0x30] sm:$0xff]
    %v239 = vld [vmem:[#allocation7 + $0x38] sm:$0xff]
    %v240 = vld [vmem:[#allocation7 + $0x40] sm:$0xff]
    %v241 = vld [vmem:[#allocation7 + $0x48] sm:$0xff]
    %v242 = vld [vmem:[#allocation7 + $0x50] sm:$0xff]
    %v243 = vld [vmem:[#allocation7 + $0x58] sm:$0xff]
    %v244 = vld [vmem:[#allocation7 + $0x60] sm:$0xff]
    %v245 = vld [vmem:[#allocation7 + $0x68] sm:$0xff]
    %v246 = vld [vmem:[#allocation7 + $0x70] sm:$0xff]
    %v247 = vld [vmem:[#allocation7 + $0x78] sm:$0xff]
    %v248 = vld [vmem:[#allocation7 + $0x80] sm:$0xff]
    %v249 = vld [vmem:[#allocation7 + $0x88] sm:$0xff]
    %v250 = vld [vmem:[#allocation7 + $0x90] sm:$0xff]
    %v251 = vld [vmem:[#allocation7 + $0x98] sm:$0xff]
    %v252 = vld [vmem:[#allocation7 + $0xa0] sm:$0xff]
    %v253 = vld [vmem:[#allocation7 + $0xa8] sm:$0xff]
    %v254 = vld [vmem:[#allocation7 + $0xb0] sm:$0xff]
    %v255 = vld [vmem:[#allocation7 + $0xb8] sm:$0xff]
    %v256 = vld [vmem:[#allocation7 + $0xc0] sm:$0xff]
    %v257 = vld [vmem:[#allocation7 + $0xc8] sm:$0xff]
    %v258 = vld [vmem:[#allocation7 + $0xd0] sm:$0xff]
    %v259 = vld [vmem:[#allocation7 + $0xd8] sm:$0xff]
    %v260 = vld [vmem:[#allocation7 + $0xe0] sm:$0xff]
    %v261 = vld [vmem:[#allocation7 + $0xe8] sm:$0xff]
    %v262 = vld [vmem:[#allocation7 + $0xf0] sm:$0xff]
    %v263 = vld [vmem:[#allocation7 + $0xf8] sm:$0xff]
    %v264 = vld [vmem:[%s4] sm:$0x3]
    %v265 = vtanh.pop %v226
    %v266 = vtanh.pop %v228
    %v267 = vpack.c.bf16 %v265, %v265
    %v268 = vpack.c.bf16 %v266, %v266
    %v301 = vunpack.c.l.b16 %v232
    %v302 = vunpack.c.h.b16 %v232
    %v303 = vunpack.c.l.b16 %v233
    %v304 = vunpack.c.h.b16 %v233
    %v305 = vunpack.c.l.b16 %v234
    %v306 = vunpack.c.h.b16 %v234
    %v307 = vunpack.c.l.b16 %v235
    %v308 = vunpack.c.h.b16 %v235
    %v309 = vunpack.c.l.b16 %v236
    %v310 = vunpack.c.h.b16 %v236
    %v311 = vunpack.c.l.b16 %v237
    %v312 = vunpack.c.h.b16 %v237
    %v313 = vunpack.c.l.b16 %v238
    %v314 = vunpack.c.h.b16 %v238
    %v315 = vunpack.c.l.b16 %v239
    %v316 = vunpack.c.h.b16 %v239
    %v317 = vunpack.c.l.b16 %v240
    %v318 = vunpack.c.h.b16 %v240
    %v319 = vunpack.c.l.b16 %v241
    %v320 = vunpack.c.h.b16 %v241
    %v321 = vunpack.c.l.b16 %v242
    %v322 = vunpack.c.h.b16 %v242
    %v323 = vunpack.c.l.b16 %v243
    %v324 = vunpack.c.h.b16 %v243
    %v325 = vunpack.c.l.b16 %v244
    %v326 = vunpack.c.h.b16 %v244
    %v327 = vunpack.c.l.b16 %v245
    %v328 = vunpack.c.h.b16 %v245
    %v329 = vunpack.c.l.b16 %v246
    %v330 = vunpack.c.h.b16 %v246
    %v331 = vunpack.c.l.b16 %v247
    %v332 = vunpack.c.h.b16 %v247
    %v333 = vunpack.c.l.b16 %v248
    %v334 = vunpack.c.h.b16 %v248
    %v335 = vunpack.c.l.b16 %v249
    %v336 = vunpack.c.h.b16 %v249
    %v337 = vunpack.c.l.b16 %v250
    %v338 = vunpack.c.h.b16 %v250
    %v339 = vunpack.c.l.b16 %v251
    %v340 = vunpack.c.h.b16 %v251
    %v341 = vunpack.c.l.b16 %v252
    %v342 = vunpack.c.h.b16 %v252
    %v343 = vunpack.c.l.b16 %v253
    %v344 = vunpack.c.h.b16 %v253
    %v345 = vunpack.c.l.b16 %v254
    %v346 = vunpack.c.h.b16 %v254
    %v347 = vunpack.c.l.b16 %v255
    %v348 = vunpack.c.h.b16 %v255
    %v349 = vunpack.c.l.b16 %v256
    %v350 = vunpack.c.h.b16 %v256
    %v351 = vunpack.c.l.b16 %v257
    %v352 = vunpack.c.h.b16 %v257
    %v353 = vunpack.c.l.b16 %v258
    %v354 = vunpack.c.h.b16 %v258
    %v355 = vunpack.c.l.b16 %v259
    %v356 = vunpack.c.h.b16 %v259
    %v357 = vunpack.c.l.b16 %v260
    %v358 = vunpack.c.h.b16 %v260
    %v359 = vunpack.c.l.b16 %v261
    %v360 = vunpack.c.h.b16 %v261
    %v361 = vunpack.c.l.b16 %v262
    %v362 = vunpack.c.h.b16 %v262
    %v363 = vunpack.c.l.b16 %v263
    %v364 = vunpack.c.h.b16 %v263
    %v365 = vpack.c.b16 %v303, %v301
    %v366 = vpack.c.b16 %v304, %v302
    %v367 = vpack.c.b16 %v307, %v305
    %v368 = vpack.c.b16 %v308, %v306
    %v369 = vpack.c.b16 %v311, %v309
    %v370 = vpack.c.b16 %v312, %v310
    %v371 = vpack.c.b16 %v315, %v313
    %v372 = vpack.c.b16 %v316, %v314
    %v373 = vpack.c.b16 %v319, %v317
    %v374 = vpack.c.b16 %v320, %v318
    %v375 = vpack.c.b16 %v323, %v321
    %v376 = vpack.c.b16 %v324, %v322
    %v377 = vpack.c.b16 %v327, %v325
    %v378 = vpack.c.b16 %v328, %v326
    %v379 = vpack.c.b16 %v331, %v329
    %v380 = vpack.c.b16 %v332, %v330
    %v381 = vpack.c.b16 %v335, %v333
    %v382 = vpack.c.b16 %v336, %v334
    %v383 = vpack.c.b16 %v339, %v337
    %v384 = vpack.c.b16 %v340, %v338
    %v385 = vpack.c.b16 %v343, %v341
    %v386 = vpack.c.b16 %v344, %v342
    %v387 = vpack.c.b16 %v347, %v345
    %v388 = vpack.c.b16 %v348, %v346
    %v389 = vpack.c.b16 %v351, %v349
    %v390 = vpack.c.b16 %v352, %v350
    %v391 = vpack.c.b16 %v355, %v353
    %v392 = vpack.c.b16 %v356, %v354
    %v393 = vpack.c.b16 %v359, %v357
    %v394 = vpack.c.b16 %v360, %v358
    %v395 = vpack.c.b16 %v363, %v361
    %v396 = vpack.c.b16 %v364, %v362
    %v430 = vlaneseq
    %v431 = vshrl.u32 %v430, 7
    %v432 = vsub.s32 0, %v431
    %v433 = vrot.slane %v264, %v432
    %v434 = vlaneseq
    %v435 = vshrl.u32 %v434, 7
    %v436 = vsub.s32 1, %v435
    %v437 = vrot.slane %v264, %v436
    %440 = vmatprep.subr.bf16.mxu0 %v366
    %441 = vmatpush1.bf16.msra.mxu0 %v365
    %442 = vmatprep.subr.bf16.mxu0 %v368
    %443 = vmatpush1.bf16.msra.mxu0 %v367
    %444 = vmatprep.subr.bf16.mxu0 %v370
    %445 = vmatpush1.bf16.msra.mxu0 %v369
    %446 = vmatprep.subr.bf16.mxu0 %v372
    %447 = vmatpush1.bf16.msra.mxu0 %v371
    %448 = vmatprep.subr.bf16.mxu0 %v374
    %449 = vmatpush1.bf16.msra.mxu0 %v373
    %450 = vmatprep.subr.bf16.mxu0 %v376
    %451 = vmatpush1.bf16.msra.mxu0 %v375
    %452 = vmatprep.subr.bf16.mxu0 %v378
    %453 = vmatpush1.bf16.msra.mxu0 %v377
    %454 = vmatprep.subr.bf16.mxu0 %v380
    %455 = vmatpush1.bf16.msra.mxu0 %v379
    %456 = vmatprep.subr.bf16.mxu0 %v382
    %457 = vmatpush1.bf16.msra.mxu0 %v381
    %458 = vmatprep.subr.bf16.mxu0 %v384
    %459 = vmatpush1.bf16.msra.mxu0 %v383
    %460 = vmatprep.subr.bf16.mxu0 %v386
    %461 = vmatpush1.bf16.msra.mxu0 %v385
    %462 = vmatprep.subr.bf16.mxu0 %v388
    %463 = vmatpush1.bf16.msra.mxu0 %v387
    %464 = vmatprep.subr.bf16.mxu0 %v390
    %465 = vmatpush1.bf16.msra.mxu0 %v389
    %466 = vmatprep.subr.bf16.mxu0 %v392
    %467 = vmatpush1.bf16.msra.mxu0 %v391
    %468 = vmatprep.subr.bf16.mxu0 %v394
    %469 = vmatpush1.bf16.msra.mxu0 %v393
    %470 = vmatprep.subr.bf16.mxu0 %v396
    %471 = vmatpush1.bf16.msra.mxu0 %v395
    %472 = vmatprep.mubr.bf16.mxu0 %v268
    %473 = vmatmul.mubr.bf16.gmra.mrb[0].mxu0 %v267
    %v474 = vpop.f32.mrb[0].mxu0
    %v475 = vadd.f32 %v433, %v474
    %v476 = vpop.f32.mrb[0].mxu0
    %v477 = vadd.f32 %v437, %v476
    %v478 = vpop.f32.mrb[0].mxu0
    %v479 = vpop.f32.mrb[0].mxu0
    %480 = vdwg.mxu0
    %v481 = vld [vmem:[#allocation8] sm:$0xf]
    %v482 = vld [vmem:[#allocation8 + $0x4] sm:$0xf]
    %v483 = vld [vmem:[#allocation8 + $0x8] sm:$0xf]
    %v484 = vld [vmem:[#allocation8 + $0xc] sm:$0xf]
    %v485 = vld [vmem:[#allocation8 + $0x10] sm:$0xf]
    %v486 = vld [vmem:[#allocation8 + $0x14] sm:$0xf]
    %v487 = vld [vmem:[#allocation8 + $0x18] sm:$0xf]
    %v488 = vld [vmem:[#allocation8 + $0x1c] sm:$0xf]
    %v489 = vld [vmem:[#allocation8 + $0x20] sm:$0xf]
    %v490 = vld [vmem:[#allocation8 + $0x24] sm:$0xf]
    %v491 = vld [vmem:[#allocation8 + $0x28] sm:$0xf]
    %v492 = vld [vmem:[#allocation8 + $0x2c] sm:$0xf]
    %v493 = vld [vmem:[#allocation8 + $0x30] sm:$0xf]
    %v494 = vld [vmem:[#allocation8 + $0x34] sm:$0xf]
    %v495 = vld [vmem:[#allocation8 + $0x38] sm:$0xf]
    %v496 = vld [vmem:[#allocation8 + $0x3c] sm:$0xf]
    %v497 = vld [vmem:[#allocation8 + $0x40] sm:$0xf]
    %v498 = vld [vmem:[#allocation8 + $0x44] sm:$0xf]
    %v499 = vld [vmem:[#allocation8 + $0x48] sm:$0xf]
    %v500 = vld [vmem:[#allocation8 + $0x4c] sm:$0xf]
    %v501 = vld [vmem:[#allocation8 + $0x50] sm:$0xf]
    %v502 = vld [vmem:[#allocation8 + $0x54] sm:$0xf]
    %v503 = vld [vmem:[#allocation8 + $0x58] sm:$0xf]
    %v504 = vld [vmem:[#allocation8 + $0x5c] sm:$0xf]
    %v505 = vld [vmem:[#allocation8 + $0x60] sm:$0xf]
    %v506 = vld [vmem:[#allocation8 + $0x64] sm:$0xf]
    %v507 = vld [vmem:[#allocation8 + $0x68] sm:$0xf]
    %v508 = vld [vmem:[#allocation8 + $0x6c] sm:$0xf]
    %v509 = vld [vmem:[#allocation8 + $0x70] sm:$0xf]
    %v510 = vld [vmem:[#allocation8 + $0x74] sm:$0xf]
    %v511 = vld [vmem:[#allocation8 + $0x78] sm:$0xf]
    %v512 = vld [vmem:[#allocation8 + $0x7c] sm:$0xf]
    %v513 = vld [vmem:[%s6] sm:$0x1]
    %v514 = vtanh.pop %v475
    %v515 = vtanh.pop %v477
    %v516 = vpack.c.bf16 %v514, %v514
    %v517 = vpack.c.bf16 %v515, %v515
    %v550 = vunpack.c.l.b16 %v481
    %v551 = vunpack.c.l.b16 %v482
    %v552 = vunpack.c.l.b16 %v483
    %v553 = vunpack.c.l.b16 %v484
    %v554 = vunpack.c.l.b16 %v485
    %v555 = vunpack.c.l.b16 %v486
    %v556 = vunpack.c.l.b16 %v487
    %v557 = vunpack.c.l.b16 %v488
    %v558 = vunpack.c.l.b16 %v489
    %v559 = vunpack.c.l.b16 %v490
    %v560 = vunpack.c.l.b16 %v491
    %v561 = vunpack.c.l.b16 %v492
    %v562 = vunpack.c.l.b16 %v493
    %v563 = vunpack.c.l.b16 %v494
    %v564 = vunpack.c.l.b16 %v495
    %v565 = vunpack.c.l.b16 %v496
    %v566 = vunpack.c.l.b16 %v497
    %v567 = vunpack.c.l.b16 %v498
    %v568 = vunpack.c.l.b16 %v499
    %v569 = vunpack.c.l.b16 %v500
    %v570 = vunpack.c.l.b16 %v501
    %v571 = vunpack.c.l.b16 %v502
    %v572 = vunpack.c.l.b16 %v503
    %v573 = vunpack.c.l.b16 %v504
    %v574 = vunpack.c.l.b16 %v505
    %v575 = vunpack.c.l.b16 %v506
    %v576 = vunpack.c.l.b16 %v507
    %v577 = vunpack.c.l.b16 %v508
    %v578 = vunpack.c.l.b16 %v509
    %v579 = vunpack.c.l.b16 %v510
    %v580 = vunpack.c.l.b16 %v511
    %v581 = vunpack.c.l.b16 %v512
    %v582 = vpack.c.b16 %v551, %v550
    %v583 = vpack.c.b16 %v553, %v552
    %v584 = vpack.c.b16 %v555, %v554
    %v585 = vpack.c.b16 %v557, %v556
    %v586 = vpack.c.b16 %v559, %v558
    %v587 = vpack.c.b16 %v561, %v560
    %v588 = vpack.c.b16 %v563, %v562
    %v589 = vpack.c.b16 %v565, %v564
    %v590 = vpack.c.b16 %v567, %v566
    %v591 = vpack.c.b16 %v569, %v568
    %v592 = vpack.c.b16 %v571, %v570
    %v593 = vpack.c.b16 %v573, %v572
    %v594 = vpack.c.b16 %v575, %v574
    %v595 = vpack.c.b16 %v577, %v576
    %v596 = vpack.c.b16 %v579, %v578
    %v597 = vpack.c.b16 %v581, %v580
    %614 = vmatprep.subr.bf16.mxu0 0
    %615 = vmatpush1.bf16.msra.mxu0 %v582
    %616 = vmatprep.subr.bf16.mxu0 0
    %617 = vmatpush1.bf16.msra.mxu0 %v583
    %618 = vmatprep.subr.bf16.mxu0 0
    %619 = vmatpush1.bf16.msra.mxu0 %v584
    %620 = vmatprep.subr.bf16.mxu0 0
    %621 = vmatpush1.bf16.msra.mxu0 %v585
    %622 = vmatprep.subr.bf16.mxu0 0
    %623 = vmatpush1.bf16.msra.mxu0 %v586
    %624 = vmatprep.subr.bf16.mxu0 0
    %625 = vmatpush1.bf16.msra.mxu0 %v587
    %626 = vmatprep.subr.bf16.mxu0 0
    %627 = vmatpush1.bf16.msra.mxu0 %v588
    %628 = vmatprep.subr.bf16.mxu0 0
    %629 = vmatpush1.bf16.msra.mxu0 %v589
    %630 = vmatprep.subr.bf16.mxu0 0
    %631 = vmatpush1.bf16.msra.mxu0 %v590
    %632 = vmatprep.subr.bf16.mxu0 0
    %633 = vmatpush1.bf16.msra.mxu0 %v591
    %634 = vmatprep.subr.bf16.mxu0 0
    %635 = vmatpush1.bf16.msra.mxu0 %v592
    %636 = vmatprep.subr.bf16.mxu0 0
    %637 = vmatpush1.bf16.msra.mxu0 %v593
    %638 = vmatprep.subr.bf16.mxu0 0
    %639 = vmatpush1.bf16.msra.mxu0 %v594
    %640 = vmatprep.subr.bf16.mxu0 0
    %641 = vmatpush1.bf16.msra.mxu0 %v595
    %642 = vmatprep.subr.bf16.mxu0 0
    %643 = vmatpush1.bf16.msra.mxu0 %v596
    %644 = vmatprep.subr.bf16.mxu0 0
    %645 = vmatpush1.bf16.msra.mxu0 %v597
    %646 = vmatprep.mubr.bf16.mxu0 %v517
    %647 = vmatmul.mubr.bf16.gmra.mrb[0].mxu0 %v516
    %v648 = vpop.f32.mrb[0].mxu0
    %v649 = vadd.f32 %v513, %v648
    %v650 = vpop.f32.mrb[0].mxu0
    %v651 = vpop.f32.mrb[0].mxu0
    %v652 = vpop.f32.mrb[0].mxu0
    %653 = vdwg.mxu0
    %v654 = vlaneseq
    %v655 = vand.u32 %v654, 127
    %v656 = vand.u32 %v655, 15
    %vm657 = vcmp.lt.s32.totalorder %v656, 8
    %v658 = vmul.f32 %v649, 1.442695
    %v659 = vpow.pop %v658
    %v660 = vmax.f32 %v659, 0.001
    %v661 = vmin.f32 %v660, 10.0
    %v662 = vsel %vm657, %v649, %v661
    %663 = vst [vmem:[#allocation10] sm:$0x1] %v662
    // Predicated region
    $region46: #{tpu_custom_call.1} parent=1 // pred_check
      _
    $region47: #{tpu_custom_call.1} parent=1 // pred_check_branch
      %665 = sbr.rel (0) target = $region49
    $region48: #{tpu_custom_call.1} parent=1 // pred_region
      %s667 = ssub.s32 16, 16
      %668 = vsyncadd [#allocation4], %s667
      %s670 = sshll.u32 [#allocation10], 4
      %s671 = int_to_ptr.vmem [resolvable:$true] %s670
      %673 = dma.vmem_to_hbm [thread:$0]  %s671, 16, %s7, [#allocation4]
    $region49: #{tpu_custom_call.1} parent=1 // pred_fallthru
      _
    // Predicated region
    $region50: #{tpu_custom_call.1} parent=1 // pred_check
      _
    $region51: #{tpu_custom_call.1} parent=1 // pred_check_branch
      %675 = sbr.rel (0) target = $region53
    $region52: #{tpu_custom_call.1} parent=1 // pred_region
      %676 = dma.done [#allocation4], 16
    $region53: #{tpu_custom_call.1} parent=1 // pred_fallthru
      _
    %677 = vsyncpa [#allocation3], 1
    %678 = vsyncpa [#allocation6], 1
    %679 = vsyncpa [#allocation9], 1
    %680 = vsyncpa [#allocation4], 1

</llo_original>
